<compile_context>
chip_gen: v7x
topology: tpu7x:2x2x1
jax: 0.10.0
libtpu: 0.0.40
codegen_flags: <defaults>
</compile_context>

<pallas_src>
import functools

import jax
import jax.numpy as jnp
from jax import lax
from jax.experimental import pallas as pl
from jax.experimental.pallas import tpu as pltpu


def _dice_kernel(x_ref, t_ref, o_ref, acc_inter, acc_sum, *,
                 r_total, ts, smooth, mask_rows):
    d = pl.program_id(1)

    @pl.when(d == 0)
    def _():
        acc_inter[...] = jnp.zeros_like(acc_inter)
        acc_sum[...] = jnp.zeros_like(acc_sum)

    x = x_ref[...].astype(jnp.float32)      # (1, ts, 128)
    t = t_ref[...].astype(jnp.float32)      # (1, ts, 128)

    if mask_rows:
        # Ragged last row-tile: zero rows past the real extent.  (The lane
        # padding for D % 128 != 0 is already physical zeros in HBM.)
        row = d * ts + lax.broadcasted_iota(jnp.int32, x.shape, 1)
        valid = row < r_total
        x = jnp.where(valid, x, 0.0)
        t = jnp.where(valid, t, 0.0)

    # Vreg-shaped accumulation: pure VPU adds, no per-step cross-lane reduce.
    acc_inter[...] += x * t
    acc_sum[...] += x + t

    @pl.when(d == pl.num_programs(1) - 1)
    def _():
        num = 2.0 * jnp.sum(acc_inter[...]) + smooth
        den = jnp.sum(acc_sum[...]) + smooth
        o_ref[...] = jnp.full((1, 1, 1), num / den, dtype=jnp.float32)


def dice_loss(x, target, *, smooth=1.0, block_rows=1024):
    """Pallas implementation of DiceLoss.forward.

    x:      predictions, any shape with leading batch dim N (e.g. NCHW).
    target: same number of elements per sample, leading batch dim N.
    """
    x = jnp.asarray(x)
    t = jnp.asarray(target)
    n = t.shape[0]

    x2 = x.reshape(n, -1)
    t2 = t.reshape(n, -1)
    d_elems = x2.shape[1]

    # Pad the flat dim to a lane multiple only when needed; zeros contribute
    # nothing to any of the Dice sums, so no in-kernel mask is needed for them.
    pad = (-d_elems) % 128
    if pad:
        x2 = jnp.pad(x2, ((0, 0), (0, pad)))
        t2 = jnp.pad(t2, ((0, 0), (0, pad)))
    r = (d_elems + pad) // 128

    # Row-major-preserving (free) view to a lane-dense 3-D layout.
    x3 = x2.reshape(n, r, 128)
    t3 = t2.reshape(n, r, 128)

    if r <= block_rows:
        ts = r                       # full second-minor extent (always legal)
    else:
        ts = block_rows              # multiple of 8
    n_d = pl.cdiv(r, ts)
    mask_rows = (r % ts) != 0

    kernel = functools.partial(
        _dice_kernel,
        r_total=r, ts=ts, smooth=float(smooth), mask_rows=mask_rows)

    dice = pl.pallas_call(
        kernel,
        out_shape=jax.ShapeDtypeStruct((n, 1, 1), jnp.float32),
        grid_spec=pltpu.PrefetchScalarGridSpec(
            num_scalar_prefetch=0,
            grid=(n, n_d),
            in_specs=[
                pl.BlockSpec((1, ts, 128), lambda i, d: (i, d, 0)),  # preds
                pl.BlockSpec((1, ts, 128), lambda i, d: (i, d, 0)),  # targets
            ],
            out_specs=pl.BlockSpec((1, 1, 1), lambda i, d: (i, 0, 0)),
            scratch_shapes=[
                pltpu.VMEM((1, ts, 128), jnp.float32),   # sum(x*t) partials
                pltpu.VMEM((1, ts, 128), jnp.float32),   # sum(x)+sum(t) partials
            ],
        ),
        compiler_params=pltpu.CompilerParams(
            dimension_semantics=("parallel", "arbitrary"),
        ),
    )(x3, t3)

    # Tiny final combine (N scalars), matching: loss = 1 - dice.sum() / N.
    return 1.0 - jnp.sum(dice) / jnp.float32(n)


def _reference_dice_loss(x, target, smooth=1.0):
    """Pure-JAX reference mirroring the PyTorch module."""
    n = target.shape[0]
    xf = x.reshape(n, -1).astype(jnp.float32)
    tf_ = target.reshape(n, -1).astype(jnp.float32)
    inter = jnp.sum(xf * tf_, axis=1)
    dice = (2.0 * inter + smooth) / (jnp.sum(xf, axis=1)
                                     + jnp.sum(tf_, axis=1) + smooth)
    return 1.0 - jnp.sum(dice) / n


if __name__ == "__main__":
    key = jax.random.PRNGKey(0)
    kx, kt = jax.random.split(key)

    N, C, H, W = 2, 4, 16, 16
    x = jax.nn.sigmoid(jax.random.normal(kx, (N, C, H, W), dtype=jnp.float32))
    target = (jax.random.uniform(kt, (N, C, H, W)) > 0.5).astype(jnp.float32)

    loss = dice_loss(x, target)
    loss = jax.block_until_ready(loss)

    ref = _reference_dice_loss(x, target)
    assert jnp.allclose(loss, ref, rtol=1e-5, atol=1e-6), (loss, ref)

    print("KERNEL_OK")
</pallas_src>

<mosaic_0001>
module attributes {stable_mosaic.version = 11 : i64} {
  func.func @_dice_kernel(%arg0: i32, %arg1: i32, %arg2: memref<1x8x128xf32, #tpu.memory_space<vmem>>, %arg3: memref<1x8x128xf32, #tpu.memory_space<vmem>>, %arg4: memref<1x1x1xf32, #tpu.memory_space<vmem>>, %arg5: memref<1x8x128xf32, #tpu.memory_space<vmem>>, %arg6: memref<1x8x128xf32, #tpu.memory_space<vmem>>) attributes {dimension_semantics = [#tpu.dimension_semantics<parallel>, #tpu.dimension_semantics<arbitrary>], iteration_bounds = array<i64: 2, 1>, scalar_prefetch = 0 : i64, scratch_operands = 2 : i64, tpu.core_type = #tpu.core_type<tc>, window_params = [{transform_indices = @transform_0, window_bounds = array<i64: 1, 8, 128>}, {transform_indices = @transform_1, window_bounds = array<i64: 1, 8, 128>}, {transform_indices = @transform_2, window_bounds = array<i64: 1, 1, 1>}]} {
    %c0_i32 = arith.constant 0 : i32
    %0 = arith.cmpi eq, %arg1, %c0_i32 : i32
    %1 = arith.extui %0 : i1 to i32
    %c0_i32_0 = arith.constant 0 : i32
    %2 = arith.cmpi ne, %1, %c0_i32_0 : i32
    scf.if %2 {
      %cst = arith.constant 0.000000e+00 : f32
      %16 = vector.broadcast %cst : f32 to vector<1x8x128xf32>
      %c0_20 = arith.constant 0 : index
      %c0_21 = arith.constant 0 : index
      %c0_22 = arith.constant 0 : index
      %17 = vector.load %arg5[%c0_20, %c0_21, %c0_22] : memref<1x8x128xf32, #tpu.memory_space<vmem>>, vector<1x8x128xf32>
      tpu.vector_store %arg5[%c0_20, %c0_21, %c0_22], %16 {strides = array<i32>} : memref<1x8x128xf32, #tpu.memory_space<vmem>>, vector<1x8x128xf32>,
      %cst_23 = arith.constant 0.000000e+00 : f32
      %18 = vector.broadcast %cst_23 : f32 to vector<1x8x128xf32>
      %c0_24 = arith.constant 0 : index
      %c0_25 = arith.constant 0 : index
      %c0_26 = arith.constant 0 : index
      %19 = vector.load %arg6[%c0_24, %c0_25, %c0_26] : memref<1x8x128xf32, #tpu.memory_space<vmem>>, vector<1x8x128xf32>
      tpu.vector_store %arg6[%c0_24, %c0_25, %c0_26], %18 {strides = array<i32>} : memref<1x8x128xf32, #tpu.memory_space<vmem>>, vector<1x8x128xf32>,
    } else {
    }
    %c0 = arith.constant 0 : index
    %c0_1 = arith.constant 0 : index
    %c0_2 = arith.constant 0 : index
    %3 = vector.load %arg2[%c0, %c0_1, %c0_2] : memref<1x8x128xf32, #tpu.memory_space<vmem>>, vector<1x8x128xf32>
    %c0_3 = arith.constant 0 : index
    %c0_4 = arith.constant 0 : index
    %c0_5 = arith.constant 0 : index
    %4 = vector.load %arg3[%c0_3, %c0_4, %c0_5] : memref<1x8x128xf32, #tpu.memory_space<vmem>>, vector<1x8x128xf32>
    %c0_6 = arith.constant 0 : index
    %c0_7 = arith.constant 0 : index
    %c0_8 = arith.constant 0 : index
    %5 = vector.load %arg5[%c0_6, %c0_7, %c0_8] : memref<1x8x128xf32, #tpu.memory_space<vmem>>, vector<1x8x128xf32>
    %6 = arith.mulf %3, %4 : vector<1x8x128xf32>
    %7 = arith.addf %5, %6 : vector<1x8x128xf32>
    %c0_9 = arith.constant 0 : index
    %c0_10 = arith.constant 0 : index
    %c0_11 = arith.constant 0 : index
    %8 = vector.load %arg5[%c0_9, %c0_10, %c0_11] : memref<1x8x128xf32, #tpu.memory_space<vmem>>, vector<1x8x128xf32>
    tpu.vector_store %arg5[%c0_9, %c0_10, %c0_11], %7 {strides = array<i32>} : memref<1x8x128xf32, #tpu.memory_space<vmem>>, vector<1x8x128xf32>,
    %c0_12 = arith.constant 0 : index
    %c0_13 = arith.constant 0 : index
    %c0_14 = arith.constant 0 : index
    %9 = vector.load %arg6[%c0_12, %c0_13, %c0_14] : memref<1x8x128xf32, #tpu.memory_space<vmem>>, vector<1x8x128xf32>
    %10 = arith.addf %3, %4 : vector<1x8x128xf32>
    %11 = arith.addf %9, %10 : vector<1x8x128xf32>
    %c0_15 = arith.constant 0 : index
    %c0_16 = arith.constant 0 : index
    %c0_17 = arith.constant 0 : index
    %12 = vector.load %arg6[%c0_15, %c0_16, %c0_17] : memref<1x8x128xf32, #tpu.memory_space<vmem>>, vector<1x8x128xf32>
    tpu.vector_store %arg6[%c0_15, %c0_16, %c0_17], %11 {strides = array<i32>} : memref<1x8x128xf32, #tpu.memory_space<vmem>>, vector<1x8x128xf32>,
    %c0_i32_18 = arith.constant 0 : i32
    %13 = arith.cmpi eq, %arg1, %c0_i32_18 : i32
    %14 = arith.extui %13 : i1 to i32
    %c0_i32_19 = arith.constant 0 : i32
    %15 = arith.cmpi ne, %14, %c0_i32_19 : i32
    scf.if %15 {
      %c0_20 = arith.constant 0 : index
      %c0_21 = arith.constant 0 : index
      %c0_22 = arith.constant 0 : index
      %16 = vector.load %arg5[%c0_20, %c0_21, %c0_22] : memref<1x8x128xf32, #tpu.memory_space<vmem>>, vector<1x8x128xf32>
      %17 = vector.shape_cast %16 : vector<1x8x128xf32> to vector<1x1x8x128xf32>
      %cst = arith.constant dense<0.000000e+00> : vector<1xf32>
      %18 = vector.multi_reduction <add>, %17, %cst [1, 2, 3] : vector<1x1x8x128xf32> to vector<1xf32>
      %19 = vector.shape_cast %18 : vector<1xf32> to vector<1x1x1x1xf32>
      %20 = vector.extract %19[0, 0, 0, 0] : f32 from vector<1x1x1x1xf32>
      %cst_23 = arith.constant 2.000000e+00 : f32
      %21 = arith.mulf %cst_23, %20 : f32
      %cst_24 = arith.constant 1.000000e+00 : f32
      %22 = arith.addf %21, %cst_24 : f32
      %c0_25 = arith.constant 0 : index
      %c0_26 = arith.constant 0 : index
      %c0_27 = arith.constant 0 : index
      %23 = vector.load %arg6[%c0_25, %c0_26, %c0_27] : memref<1x8x128xf32, #tpu.memory_space<vmem>>, vector<1x8x128xf32>
      %24 = vector.shape_cast %23 : vector<1x8x128xf32> to vector<1x1x8x128xf32>
      %cst_28 = arith.constant dense<0.000000e+00> : vector<1xf32>
      %25 = vector.multi_reduction <add>, %24, %cst_28 [1, 2, 3] : vector<1x1x8x128xf32> to vector<1xf32>
      %26 = vector.shape_cast %25 : vector<1xf32> to vector<1x1x1x1xf32>
      %27 = vector.extract %26[0, 0, 0, 0] : f32 from vector<1x1x1x1xf32>
      %cst_29 = arith.constant 1.000000e+00 : f32
      %28 = arith.addf %27, %cst_29 : f32
      %29 = arith.divf %22, %28 : f32
      %30 = vector.broadcast %29 : f32 to vector<1x1x1xf32>
      %c0_30 = arith.constant 0 : index
      %c0_31 = arith.constant 0 : index
      %c0_32 = arith.constant 0 : index
      %31 = vector.load %arg4[%c0_30, %c0_31, %c0_32] : memref<1x1x1xf32, #tpu.memory_space<vmem>>, vector<1x1x1xf32>
      tpu.vector_store %arg4[%c0_30, %c0_31, %c0_32], %30 {strides = array<i32>} : memref<1x1x1xf32, #tpu.memory_space<vmem>>, vector<1x1x1xf32>,
    } else {
    }
    return
  }
  func.func @transform_0(%arg0: i32, %arg1: i32) -> (i32, i32, i32) {
    %c0_i32 = arith.constant 0 : i32
    %c0_i32_0 = arith.constant 0 : i32
    return %arg0, %arg1, %c0_i32 : i32, i32, i32
  }
  func.func @transform_1(%arg0: i32, %arg1: i32) -> (i32, i32, i32) {
    %c0_i32 = arith.constant 0 : i32
    %c0_i32_0 = arith.constant 0 : i32
    return %arg0, %arg1, %c0_i32 : i32, i32, i32
  }
  func.func @transform_2(%arg0: i32, %arg1: i32) -> (i32, i32, i32) {
    %c0_i32 = arith.constant 0 : i32
    %c0_i32_0 = arith.constant 0 : i32
    %c0_i32_1 = arith.constant 0 : i32
    return %arg0, %c0_i32, %c0_i32_0 : i32, i32, i32
  }
}

</mosaic_0001>

<llo_original>
// kernel: tpu_custom_call.1
$region0: #{tpu_custom_call.1}
  #allocation0 [shape = 'u32[]', space=smem, size = 0x4, offset = 0x4, fixed_abs, tag = 'smem constant byte address 0x4 - core index']
  #allocation1 [shape = 'u32[144,128]{1,0:T(1,128)}', space=vmem, size = 0x12000, scoped, tag = 'internal scratch']
  #allocation2 [shape = 'f32[1,8,128]{2,1,0:T(8,128)}', space=vmem, size = 0x1000, scoped, tag = 'scratch operand']
  #allocation3 [shape = 'f32[1,8,128]{2,1,0:T(8,128)}', space=vmem, size = 0x1000, scoped, tag = 'scratch operand']
  %s0 = inlined_call_operand.hbm [shape: f32[2,8,128], index: 0, kind: input, shape index: {}]
  %s1 = inlined_call_operand.hbm [shape: f32[2,8,128], index: 1, kind: input, shape index: {}]
  %s2 = inlined_call_operand.vmem [shape: f32[2,1,1], index: 2, kind: output, shape index: {}]
  %s3 = sld [smem:[#allocation0]]
  $region57: #{tpu_custom_call.1} parent=0
    _
  %s5 = ssub.s32 1, %s3
  %s6 = scalar_select 0, %s5, %s3
  $region1: #{tpu_custom_call.1} parent=0
    #allocation4 [shape = 'u8[8192]{0}', space=vmem, size = 0x2000, scoped, tag = 'input window, operand 0']
    #allocation5 [shape = 's32[2]{0}', space=sflag, size = 0x8, scoped, tag = 'scoped memory for tpu_custom_call.1']
    #allocation6 [shape = 'u8[8192]{0}', space=vmem, size = 0x2000, scoped, tag = 'input window, operand 1']
    #allocation7 [shape = 's32[2]{0}', space=sflag, size = 0x8, scoped, tag = 'scoped memory for tpu_custom_call.1']
    %7 = vsyncpa [#allocation5], 0
    %s8 = scalar_lea.sflag [#allocation5], 1
    %9 = vsyncpa %s8, 0
    %10 = vsyncpa [#allocation7], 0
    %s11 = scalar_lea.sflag [#allocation7], 1
    %12 = vsyncpa %s11, 0
    loop: start=0, step=1, limit=4
    $region2: #{tpu_custom_call.1} parent=1 // loop_pre_header
      _
    $region3: #{tpu_custom_call.1} parent=1 // loop_header
      %s14 = sphi 0, %s18
      %p15 = scmp.ge.s32.totalorder %s14, 4
      %s21 = sphi 0, %s33
      %s22 = sphi 0, %s29
      %s23 = sphi 0, %s21
      %s24 = sphi 0, %s22
      %s25 = sphi 0, %s23
      %s26 = sphi 0, %s24
      %s38 = sphi 0, %s40
      %s41 = sphi 0, %s38
      %s42 = sphi 0, %s41
      %s58 = sphi 0, %s42
      %s66 = sphi 0, %s68
      %s69 = sphi 0, %s66
      %s70 = sphi 0, %s69
      %s86 = sphi 0, %s70
      %s92 = sphi 0, %s94
      %s95 = sphi 0, %s92
      %s96 = sphi 0, %s95
      %s112 = sphi 0, %s96
    $region4: #{tpu_custom_call.1} parent=1 // loop_header_branch
      %17 = sbr.rel (%p15) target = $region8
    $region5: #{tpu_custom_call.1} parent=1 // loop_body
      %s19 = ssub.s32 %s14, 1
      %s20 = ssub.s32 %s14, 2
      %s27 = sadd.s32 1, %s22
      %p28 = scmp.ge.s32.totalorder %s27, 1
      %s29 = scalar_select %p28, 0, %s27
      %s30 = sadd.s32 1, %s21
      %s31 = scalar_select %p28, %s30, %s21
      %p32 = scmp.ge.s32.totalorder %s31, 2
      %s33 = scalar_select %p32, 0, %s31
      %s34 = ssub.s32 %s21, %s33
      %s35 = ssub.s32 %s22, %s29
      %s36 = sor.u32 %s34, %s35
      %p37 = scmp.eq.s32.totalorder %s36, 0
      %s39 = sadd.s32 %s38, 1
      %s40 = scalar_select %p37, %s38, %s39
      %p43 = pneg %p37
      %p44 = scmp.eq.s32.totalorder %s14, 1
      %p45 = por %p43, %p44
      %p46 = scmp.ne.s32.totalorder %s38, %s41
      %p47 = scmp.eq.s32.totalorder %s14, 0
      %p48 = por %p46, %p47
      %p49 = scmp.ne.s32.totalorder %s38, %s41
      %p50 = scmp.eq.s32.totalorder %s19, 1
      %p51 = por %p49, %p50
      %p52 = scmp.ne.s32.totalorder %s41, %s42
      %p53 = scmp.eq.s32.totalorder %s19, 0
      %p54 = por %p52, %p53
      %p55 = scmp.ne.s32.totalorder %s41, %s42
      %p56 = scmp.eq.s32.totalorder %s20, 1
      %p57 = por %p55, %p56
      %p59 = scmp.ne.s32.totalorder %s42, %s58
      %p60 = scmp.eq.s32.totalorder %s20, 0
      %p61 = por %p59, %p60
      %s62 = ssub.s32 %s21, %s33
      %s63 = ssub.s32 %s22, %s29
      %s64 = sor.u32 %s62, %s63
      %p65 = scmp.eq.s32.totalorder %s64, 0
      %s67 = sadd.s32 %s66, 1
      %s68 = scalar_select %p65, %s66, %s67
      %p71 = pneg %p65
      %p72 = scmp.eq.s32.totalorder %s14, 1
      %p73 = por %p71, %p72
      %p74 = scmp.ne.s32.totalorder %s66, %s69
      %p75 = scmp.eq.s32.totalorder %s14, 0
      %p76 = por %p74, %p75
      %p77 = scmp.ne.s32.totalorder %s66, %s69
      %p78 = scmp.eq.s32.totalorder %s19, 1
      %p79 = por %p77, %p78
      %p80 = scmp.ne.s32.totalorder %s69, %s70
      %p81 = scmp.eq.s32.totalorder %s19, 0
      %p82 = por %p80, %p81
      %p83 = scmp.ne.s32.totalorder %s69, %s70
      %p84 = scmp.eq.s32.totalorder %s20, 1
      %p85 = por %p83, %p84
      %p87 = scmp.ne.s32.totalorder %s70, %s86
      %p88 = scmp.eq.s32.totalorder %s20, 0
      %p89 = por %p87, %p88
      %s90 = ssub.s32 %s21, %s33
      %p91 = scmp.eq.s32.totalorder %s90, 0
      %s93 = sadd.s32 %s92, 1
      %s94 = scalar_select %p91, %s92, %s93
      %p97 = pneg %p91
      %p98 = scmp.eq.s32.totalorder %s14, 1
      %p99 = por %p97, %p98
      %p100 = scmp.ne.s32.totalorder %s92, %s95
      %p101 = scmp.eq.s32.totalorder %s14, 0
      %p102 = por %p100, %p101
      %p103 = scmp.ne.s32.totalorder %s92, %s95
      %p104 = scmp.eq.s32.totalorder %s19, 1
      %p105 = por %p103, %p104
      %p106 = scmp.ne.s32.totalorder %s95, %s96
      %p107 = scmp.eq.s32.totalorder %s19, 0
      %p108 = por %p106, %p107
      %p109 = scmp.ne.s32.totalorder %s95, %s96
      %p110 = scmp.eq.s32.totalorder %s20, 1
      %p111 = por %p109, %p110
      %p113 = scmp.ne.s32.totalorder %s96, %s112
      %p114 = scmp.eq.s32.totalorder %s20, 0
      %p115 = por %p113, %p114
      %p116 = scmp.le.s32.totalorder 1, %s14
      %p117 = scmp.lt.s32.totalorder %s14, 3
      %p118 = pnand %p116, %p117
      %p119 = pneg %p118
      // Predicated region
      $region9: #{tpu_custom_call.1} parent=5 // pred_check
        _
      $region10: #{tpu_custom_call.1} parent=5 // pred_check_branch
        %121 = sbr.rel (%p118) target = $region12
      $region11: #{tpu_custom_call.1} parent=5 // pred_region
        %s122 = ssub.s32 %s14, 1
      $region12: #{tpu_custom_call.1} parent=5 // pred_fallthru
        _
      %p123 = scmp.lt.s32.totalorder %s14, 2
      // Predicated region
      $region13: #{tpu_custom_call.1} parent=5 // pred_check
        %p124 = pneg %p123
      $region14: #{tpu_custom_call.1} parent=5 // pred_check_branch
        %126 = sbr.rel (%p124) target = $region16
      $region15: #{tpu_custom_call.1} parent=5 // pred_region
        // Predicated region
        $region17: #{tpu_custom_call.1} parent=15 // pred_check
          %p127 = pneg %p48
        $region18: #{tpu_custom_call.1} parent=15 // pred_check_branch
          %129 = sbr.rel (%p127) target = $region20
        $region19: #{tpu_custom_call.1} parent=15 // pred_region
          %s130 = sand.u32 %s38, 1
          %s131 = scalar_lea.sflag [#allocation5], %s130
          %s132 = sand.u32 %s38, 1
          %s133 = smul.addr %s132, 8
          %s134 = scalar_lea.vmem [#allocation4], %s133
          %s136 = ssub.s32 128, 128
          %137 = vsyncadd %s131, %s136
          %s138 = sadd.s32 %s22, %s21
          %s139 = smul.addr %s138, 128
          %s140 = scalar_lea.hbm %s0, %s139
          %s142 = sshll.u32 %s134, 4
          %s143 = int_to_ptr.vmem [resolvable:$true] %s142
          %145 = dma.hbm_to_vmem [thread:$0]  %s140, 128, %s143, %s131
        $region20: #{tpu_custom_call.1} parent=15 // pred_fallthru
          _
        // Predicated region
        $region21: #{tpu_custom_call.1} parent=15 // pred_check
          %p146 = pneg %p76
        $region22: #{tpu_custom_call.1} parent=15 // pred_check_branch
          %148 = sbr.rel (%p146) target = $region24
        $region23: #{tpu_custom_call.1} parent=15 // pred_region
          %s149 = sand.u32 %s66, 1
          %s150 = scalar_lea.sflag [#allocation7], %s149
          %s151 = sand.u32 %s66, 1
          %s152 = smul.addr %s151, 8
          %s153 = scalar_lea.vmem [#allocation6], %s152
          %s155 = ssub.s32 128, 128
          %156 = vsyncadd %s150, %s155
          %s157 = sadd.s32 %s22, %s21
          %s158 = smul.addr %s157, 128
          %s159 = scalar_lea.hbm %s1, %s158
          %s161 = sshll.u32 %s153, 4
          %s162 = int_to_ptr.vmem [resolvable:$true] %s161
          %164 = dma.hbm_to_vmem [thread:$0]  %s159, 128, %s162, %s150
        $region24: #{tpu_custom_call.1} parent=15 // pred_fallthru
          _
      $region16: #{tpu_custom_call.1} parent=5 // pred_fallthru
        _
      %p165 = scmp.le.s32.totalorder 1, %s14
      %p166 = scmp.lt.s32.totalorder %s14, 3
      %p167 = pnand %p165, %p166
      %p168 = pneg %p167
      // Predicated region
      $region25: #{tpu_custom_call.1} parent=5 // pred_check
        _
      $region26: #{tpu_custom_call.1} parent=5 // pred_check_branch
        %170 = sbr.rel (%p167) target = $region28
      $region27: #{tpu_custom_call.1} parent=5 // pred_region
        %s171 = ssub.s32 %s14, 1
        %s172 = sand.u32 %s41, 1
        %s173 = scalar_lea.sflag [#allocation5], %s172
        %s174 = sand.u32 %s41, 1
        %s175 = smul.addr %s174, 8
        %s176 = scalar_lea.vmem [#allocation4], %s175
        // Predicated region
        $region29: #{tpu_custom_call.1} parent=27 // pred_check
          %p177 = pneg %p54
        $region30: #{tpu_custom_call.1} parent=27 // pred_check_branch
          %179 = sbr.rel (%p177) target = $region32
        $region31: #{tpu_custom_call.1} parent=27 // pred_region
          %180 = dma.done %s173, 128
        $region32: #{tpu_custom_call.1} parent=27 // pred_fallthru
          _
        %s181 = sand.u32 %s69, 1
        %s182 = scalar_lea.sflag [#allocation7], %s181
        %s183 = sand.u32 %s69, 1
        %s184 = smul.addr %s183, 8
        %s185 = scalar_lea.vmem [#allocation6], %s184
        // Predicated region
        $region33: #{tpu_custom_call.1} parent=27 // pred_check
          %p186 = pneg %p82
        $region34: #{tpu_custom_call.1} parent=27 // pred_check_branch
          %188 = sbr.rel (%p186) target = $region36
        $region35: #{tpu_custom_call.1} parent=27 // pred_region
          %189 = dma.done %s182, 128
        $region36: #{tpu_custom_call.1} parent=27 // pred_fallthru
          _
        %s190 = sand.u32 %s41, 1
        %s191 = scalar_lea.sflag [#allocation5], %s190
        %s192 = sand.u32 %s41, 1
        %s193 = smul.addr %s192, 8
        %s194 = scalar_lea.vmem [#allocation4], %s193
        %p195 = pneg %p54
        %p196 = pneg %p51
        %s197 = sand.u32 %s69, 1
        %s198 = scalar_lea.sflag [#allocation7], %s197
        %s199 = sand.u32 %s69, 1
        %s200 = smul.addr %s199, 8
        %s201 = scalar_lea.vmem [#allocation6], %s200
        %p202 = pneg %p82
        %p203 = pneg %p79
        %p204 = pneg %p108
        %p205 = pneg %p105
        %p206 = scmp.lt.s32.totalorder %s23, 1
        %s207 = scalar_select %p206, %s23, 1
        %s208 = scalar_lea.vmem %s2, %s207
        %p209 = scmp.lt.s32.totalorder %s23, 1
        %s210 = scalar_select %p209, %s23, 1
        %s211 = scalar_lea.vmem %s2, %s210
        %p212 = scmp.eq.s32.totalorder %s24, 0
        // Predicated region
        $region37: #{tpu_custom_call.1} parent=27 // pred_check
          %p213 = pneg %p212
        $region38: #{tpu_custom_call.1} parent=27 // pred_check_branch
          %215 = sbr.rel (%p213) target = $region40
        $region39: #{tpu_custom_call.1} parent=27 // pred_region
          %216 = vst [vmem:[#allocation2] sm:$0xff] 0.0
          %217 = vst [vmem:[#allocation3] sm:$0xff] 0.0
        $region40: #{tpu_custom_call.1} parent=27 // pred_fallthru
          _
        %v218 = vld [vmem:[%s176] sm:$0xff]
        %v219 = vld [vmem:[%s185] sm:$0xff]
        %v220 = vld [vmem:[#allocation2] sm:$0xff]
        %v221 = vmul.f32 %v218, %v219
        %v222 = vadd.f32 %v220, %v221
        %223 = vst [vmem:[#allocation2] sm:$0xff] %v222
        %v224 = vld [vmem:[#allocation3] sm:$0xff]
        %v225 = vadd.f32 %v218, %v219
        %v226 = vadd.f32 %v224, %v225
        %227 = vst [vmem:[#allocation3] sm:$0xff] %v226
        // Predicated region
        $region41: #{tpu_custom_call.1} parent=27 // pred_check
          %p228 = pneg %p212
        $region42: #{tpu_custom_call.1} parent=27 // pred_check_branch
          %230 = sbr.rel (%p228) target = $region44
        $region43: #{tpu_custom_call.1} parent=27 // pred_region
          %v231 = vld [vmem:[#allocation2] sm:$0xff]
          %232 = vadd.xlane.f32.xlu0 %v231
          %v233 = vpop.xlane.xlu0 %232
          %v234 = vrot.slane %v233, 4
          %v235 = vadd.f32 %v233, %v234
          %v236 = vrot.slane %v235, 2
          %v237 = vadd.f32 %v235, %v236
          %v238 = vrot.slane %v237, 1
          %v239 = vadd.f32 %v237, %v238
          %s240 = vtos %v239
          %s241 = smul.f32 %s240, 2.0
          %s242 = sadd.f32 %s241, 1.0
          %v243 = vld [vmem:[#allocation3] sm:$0xff]
          %244 = vadd.xlane.f32.xlu0 %v243
          %v245 = vpop.xlane.xlu0 %244
          %v246 = vrot.slane %v245, 4
          %v247 = vadd.f32 %v245, %v246
          %v248 = vrot.slane %v247, 2
          %v249 = vadd.f32 %v247, %v248
          %v250 = vrot.slane %v249, 1
          %v251 = vadd.f32 %v249, %v250
          %s252 = vtos %v251
          %s253 = sadd.f32 %s252, 1.0
          %v254 = vstv %s253
          %v255 = vrcp.pop %v254
          %s256 = vtos %v255
          %s257 = smul.f32 %s242, %s256
          %v258 = vstv %s257
          %vm259 = vcmask 0
          %260 = vst.msk [vmem:[%s211] sm:$0x1] %vm259, %v258
        $region44: #{tpu_custom_call.1} parent=27 // pred_fallthru
          _
        %p261 = scmp.lt.s32.totalorder %s23, 1
        %s262 = scalar_select %p261, %s23, 1
        %s263 = scalar_lea.vmem %s2, %s262
        // Predicated region
        $region45: #{tpu_custom_call.1} parent=27 // pred_check
          %p264 = pneg %p105
        $region46: #{tpu_custom_call.1} parent=27 // pred_check_branch
          %266 = sbr.rel (%p264) target = $region48
        $region47: #{tpu_custom_call.1} parent=27 // pred_region
          _
        $region48: #{tpu_custom_call.1} parent=27 // pred_fallthru
          _
      $region28: #{tpu_custom_call.1} parent=5 // pred_fallthru
        _
      %p267 = scmp.le.s32.totalorder 2, %s14
      // Predicated region
      $region49: #{tpu_custom_call.1} parent=5 // pred_check
        %p268 = pneg %p267
      $region50: #{tpu_custom_call.1} parent=5 // pred_check_branch
        %270 = sbr.rel (%p268) target = $region52
      $region51: #{tpu_custom_call.1} parent=5 // pred_region
        %s271 = ssub.s32 %s14, 2
        // Predicated region
        $region53: #{tpu_custom_call.1} parent=51 // pred_check
          %p272 = pneg %p111
        $region54: #{tpu_custom_call.1} parent=51 // pred_check_branch
          %274 = sbr.rel (%p272) target = $region56
        $region55: #{tpu_custom_call.1} parent=51 // pred_region
          %p275 = scmp.lt.s32.totalorder %s25, 1
          %s276 = scalar_select %p275, %s25, 1
          %s277 = scalar_lea.vmem %s2, %s276
        $region56: #{tpu_custom_call.1} parent=51 // pred_fallthru
          _
      $region52: #{tpu_custom_call.1} parent=5 // pred_fallthru
        _
    $region6: #{tpu_custom_call.1} parent=1 // loop_footer
      %s18 = sadd.s32 1, %s14
    $region7: #{tpu_custom_call.1} parent=1 // loop_footer_branch
      %13 = sbr.rel target = $region3
    $region8: #{tpu_custom_call.1} parent=1 // loop_exit
      _
    %278 = vsyncpa [#allocation5], 1
    %s279 = scalar_lea.sflag [#allocation5], 1
    %280 = vsyncpa %s279, 1
    %281 = vsyncpa [#allocation7], 1
    %s282 = scalar_lea.sflag [#allocation7], 1
    %283 = vsyncpa %s282, 1

</llo_original>
